<compile_context>
chip_gen: v7x
topology: tpu7x:2x2x1
jax: 0.10.0
libtpu: 0.0.40
codegen_flags: <defaults>
</compile_context>

<pallas_src>
import jax
import jax.numpy as jnp
from jax import lax
from jax.experimental import pallas as pl
from jax.experimental.pallas import tpu as pltpu

block_size = 32
n_embd = 40        # C
head_size = 16     # chosen head size (module takes it as a ctor arg)


def _head_kernel(x_ref, wqkv_ref, o_ref):
    # x_ref: (BT, T, C) block, wqkv_ref: (C, 3H), o_ref: (BT, T, H)
    BT, T, C = x_ref.shape
    H = o_ref.shape[-1]

    # Fused QKV projection: one MXU matmul with a sublane-full (BT*T, C) LHS.
    x2d = x_ref[...].reshape(BT * T, C)
    qkv = jnp.dot(x2d, wqkv_ref[...],
                  preferred_element_type=jnp.float32)            # (BT*T, 3H)
    qkv = qkv.reshape(BT, T, 3 * H)

    # Reference scales by C**-0.5 (C = n_embd), NOT head_size**-0.5 — keep it.
    # Apply it to q (T*H elements) instead of wei (T*T elements).
    scale = jnp.float32(C ** -0.5)
    q = qkv[:, :, 0 * H:1 * H] * scale
    k = qkv[:, :, 1 * H:2 * H]
    v = qkv[:, :, 2 * H:3 * H]

    # Attention scores: contract on H with a batch dim, no explicit transpose.
    wei = lax.dot_general(q, k,
                          dimension_numbers=(((2,), (2,)), ((0,), (0,))),
                          preferred_element_type=jnp.float32)    # (BT, T, T)

    # Causal mask (tril): col <= row kept, else -inf. Diagonal is always
    # unmasked, so no all--inf rows -> softmax is NaN-free.
    row = lax.broadcasted_iota(jnp.int32, (T, T), 0)
    col = lax.broadcasted_iota(jnp.int32, (T, T), 1)
    wei = jnp.where((col <= row)[None, :, :], wei, -jnp.inf)

    # Numerically-stable softmax with EXACT normalization (the previous
    # approx-reciprocal EUP path was not accurate enough vs the reference).
    m = jnp.max(wei, axis=-1, keepdims=True)
    p = jnp.exp(wei - m)
    p = p / jnp.sum(p, axis=-1, keepdims=True)

    # Weighted sum of values (batched matmul on the MXU).
    out = lax.dot_general(p, v,
                          dimension_numbers=(((2,), (1,)), ((0,), (0,))),
                          preferred_element_type=jnp.float32)    # (BT, T, H)
    o_ref[...] = out.astype(o_ref.dtype)


def head_forward(x, wq, wk, wv):
    """x: (B, T, C) float32; wq/wk/wv: (C, H) float32 -> (B, T, H) float32."""
    B, T, C = x.shape
    H = wq.shape[1]
    assert C == n_embd and T <= block_size

    # Fuse the three projection weights -> one DMA, one matmul inside the kernel.
    wqkv = jnp.concatenate([wq, wk, wv], axis=1)                 # (C, 3H)

    # Pack as many batch elements per grid step as gives ~256 LHS rows
    # (amortizes per-step overhead; working set is tens of KiB, far below the
    # VMEM budget on any TPU generation — keep blocks BIG).
    rows_target = 256
    bt = max(1, min(B, rows_target // max(T, 1)))
    n_steps = pl.cdiv(B, bt)

    return pl.pallas_call(
        _head_kernel,
        out_shape=jax.ShapeDtypeStruct((B, T, H), x.dtype),
        grid_spec=pltpu.PrefetchScalarGridSpec(
            num_scalar_prefetch=0,
            grid=(n_steps,),
            in_specs=[
                pl.BlockSpec((bt, T, C), lambda b: (b, 0, 0)),
                pl.BlockSpec((C, 3 * H), lambda b: (0, 0)),
            ],
            out_specs=pl.BlockSpec((bt, T, H), lambda b: (b, 0, 0)),
        ),
        compiler_params=pltpu.CompilerParams(
            dimension_semantics=("parallel",)),
    )(x, wqkv)
    # TODO(synk): if this head is used inside a multi-head layer, fuse all
    # heads into one kernel so the output last dim is num_heads*H (lane-dense).


def head_reference(x, wq, wk, wv):
    """Plain-JAX reference mirroring the PyTorch forward (full f32 precision)."""
    B, T, C = x.shape
    hp = jax.lax.Precision.HIGHEST
    q = jnp.einsum("btc,ch->bth", x, wq, precision=hp)
    k = jnp.einsum("btc,ch->bth", x, wk, precision=hp)
    v = jnp.einsum("btc,ch->bth", x, wv, precision=hp)
    wei = jnp.einsum("btd,bsd->bts", q, k, precision=hp) * (C ** -0.5)
    mask = jnp.tril(jnp.ones((T, T), dtype=bool))
    wei = jnp.where(mask[None, :, :], wei, -jnp.inf)
    wei = jax.nn.softmax(wei, axis=-1)
    return jnp.einsum("bts,bsh->bth", wei, v, precision=hp)


if __name__ == "__main__":
    key = jax.random.PRNGKey(0)
    kx, kq, kk, kv = jax.random.split(key, 4)

    B, T = 2, 8
    x = jax.random.normal(kx, (B, T, n_embd), dtype=jnp.float32)

    # deterministic parameter init (nn.Linear-like uniform)
    bound = 1.0 / (n_embd ** 0.5)
    wq = jax.random.uniform(kq, (n_embd, head_size), jnp.float32, -bound, bound)
    wk = jax.random.uniform(kk, (n_embd, head_size), jnp.float32, -bound, bound)
    wv = jax.random.uniform(kv, (n_embd, head_size), jnp.float32, -bound, bound)

    out = jax.block_until_ready(head_forward(x, wq, wk, wv))
    ref = head_reference(x, wq, wk, wv)

    assert out.shape == (B, T, head_size)
    # Only remaining divergence source: MXU default-precision matmul rounding
    # inside the kernel vs the HIGHEST-precision XLA reference.  Genuine wiring
    # bugs (mask/slice/transpose) would be O(0.1 - 1), far above this tolerance.
    err = float(jnp.max(jnp.abs(out - ref)))
    assert jnp.allclose(out, ref, atol=2e-2, rtol=2e-2), err

    print("KERNEL_OK")
</pallas_src>

<mosaic_0001>
module attributes {stable_mosaic.version = 11 : i64} {
  func.func @_head_kernel(%arg0: i32, %arg1: memref<2x8x40xf32, #tpu.memory_space<vmem>>, %arg2: memref<40x48xf32, #tpu.memory_space<vmem>>, %arg3: memref<2x8x16xf32, #tpu.memory_space<vmem>>) attributes {dimension_semantics = [#tpu.dimension_semantics<parallel>], iteration_bounds = array<i64: 1>, scalar_prefetch = 0 : i64, scratch_operands = 0 : i64, tpu.core_type = #tpu.core_type<tc>, window_params = [{transform_indices = @transform_0, window_bounds = array<i64: 2, 8, 40>}, {pipeline_mode = #tpu.pipeline_mode<synchronous>, transform_indices = @transform_1, window_bounds = array<i64: 40, 48>}, {transform_indices = @transform_2, window_bounds = array<i64: 2, 8, 16>}]} {
    %c0 = arith.constant 0 : index
    %c0_0 = arith.constant 0 : index
    %c0_1 = arith.constant 0 : index
    %0 = vector.load %arg1[%c0, %c0_0, %c0_1] : memref<2x8x40xf32, #tpu.memory_space<vmem>>, vector<2x8x40xf32>
    %1 = vector.shape_cast %0 : vector<2x8x40xf32> to vector<16x40xf32>
    %c0_2 = arith.constant 0 : index
    %c0_3 = arith.constant 0 : index
    %2 = vector.load %arg2[%c0_2, %c0_3] : memref<40x48xf32, #tpu.memory_space<vmem>>, vector<40x48xf32>
    %cst = arith.constant dense<0.000000e+00> : vector<16x48xf32>
    %3 = tpu.matmul %1, %2, %cst {dimension_numbers = #tpu.dot_dimension_numbers<[1], [0], [0], [1], [0, 0, 1, 1], [], []>} : vector<16x40xf32>, vector<40x48xf32>, vector<16x48xf32> -> vector<16x48xf32>
    %4 = vector.shape_cast %3 : vector<16x48xf32> to vector<2x8x48xf32>
    %5 = vector.extract_strided_slice %4 {offsets = [0, 0, 0], sizes = [2, 8, 16], strides = [1, 1, 1]} : vector<2x8x48xf32> to vector<2x8x16xf32>
    %cst_4 = arith.constant 0.158113882 : f32
    %6 = vector.broadcast %cst_4 : f32 to vector<2x8x16xf32>
    %7 = arith.mulf %5, %6 : vector<2x8x16xf32>
    %8 = vector.extract_strided_slice %4 {offsets = [0, 0, 16], sizes = [2, 8, 16], strides = [1, 1, 1]} : vector<2x8x48xf32> to vector<2x8x16xf32>
    %9 = vector.extract_strided_slice %4 {offsets = [0, 0, 32], sizes = [2, 8, 16], strides = [1, 1, 1]} : vector<2x8x48xf32> to vector<2x8x16xf32>
    %cst_5 = arith.constant dense<0.000000e+00> : vector<2x8x8xf32>
    %10 = tpu.matmul %7, %8, %cst_5 {dimension_numbers = #tpu.dot_dimension_numbers<[2], [2], [1], [1], [0, 0, 0, 1, 1, 1], [0], [0]>} : vector<2x8x16xf32>, vector<2x8x16xf32>, vector<2x8x8xf32> -> vector<2x8x8xf32>
    %11 = tpu.iota {dimensions = array<i32: 0>} : vector<8x8xi32>
    %12 = tpu.iota {dimensions = array<i32: 1>} : vector<8x8xi32>
    %13 = arith.cmpi sle, %12, %11 : vector<8x8xi32>
    %14 = vector.shape_cast %13 : vector<8x8xi1> to vector<1x8x8xi1>
    %cst_6 = arith.constant 0xFF800000 : f32
    %15 = vector.shape_cast %14 : vector<1x8x8xi1> to vector<1x8x8xi1>
    %16 = vector.broadcast %15 : vector<1x8x8xi1> to vector<2x8x8xi1>
    %17 = vector.broadcast %cst_6 : f32 to vector<2x8x8xf32>
    %18 = arith.select %16, %10, %17 : vector<2x8x8xi1>, vector<2x8x8xf32>
    %cst_7 = arith.constant dense<0xFF800000> : vector<2x8xf32>
    %19 = vector.multi_reduction <maximumf>, %18, %cst_7 [2] : vector<2x8x8xf32> to vector<2x8xf32>
    %20 = vector.shape_cast %19 : vector<2x8xf32> to vector<2x8x1xf32>
    %21 = vector.broadcast %20 : vector<2x8x1xf32> to vector<2x8x8xf32>
    %22 = arith.subf %18, %21 : vector<2x8x8xf32>
    %23 = math.exp %22 : vector<2x8x8xf32>
    %cst_8 = arith.constant dense<0.000000e+00> : vector<2x8xf32>
    %24 = vector.multi_reduction <add>, %23, %cst_8 [2] : vector<2x8x8xf32> to vector<2x8xf32>
    %25 = vector.shape_cast %24 : vector<2x8xf32> to vector<2x8x1xf32>
    %26 = vector.broadcast %25 : vector<2x8x1xf32> to vector<2x8x8xf32>
    %27 = arith.divf %23, %26 : vector<2x8x8xf32>
    %cst_9 = arith.constant dense<0.000000e+00> : vector<2x8x16xf32>
    %28 = tpu.matmul %27, %9, %cst_9 {dimension_numbers = #tpu.dot_dimension_numbers<[2], [1], [1], [2], [0, 0, 0, 1, 1, 2], [0], [0]>} : vector<2x8x8xf32>, vector<2x8x16xf32>, vector<2x8x16xf32> -> vector<2x8x16xf32>
    %c0_10 = arith.constant 0 : index
    %c0_11 = arith.constant 0 : index
    %c0_12 = arith.constant 0 : index
    %29 = vector.load %arg3[%c0_10, %c0_11, %c0_12] : memref<2x8x16xf32, #tpu.memory_space<vmem>>, vector<2x8x16xf32>
    tpu.vector_store %arg3[%c0_10, %c0_11, %c0_12], %28 {strides = array<i32>} : memref<2x8x16xf32, #tpu.memory_space<vmem>>, vector<2x8x16xf32>,
    return
  }
  func.func @transform_0(%arg0: i32) -> (i32, i32, i32) {
    %c0_i32 = arith.constant 0 : i32
    %c0_i32_0 = arith.constant 0 : i32
    %c0_i32_1 = arith.constant 0 : i32
    return %arg0, %c0_i32, %c0_i32_0 : i32, i32, i32
  }
  func.func @transform_1(%arg0: i32) -> (i32, i32) {
    %c0_i32 = arith.constant 0 : i32
    %c0_i32_0 = arith.constant 0 : i32
    %c0_i32_1 = arith.constant 0 : i32
    return %c0_i32, %c0_i32_0 : i32, i32
  }
  func.func @transform_2(%arg0: i32) -> (i32, i32, i32) {
    %c0_i32 = arith.constant 0 : i32
    %c0_i32_0 = arith.constant 0 : i32
    %c0_i32_1 = arith.constant 0 : i32
    return %arg0, %c0_i32, %c0_i32_0 : i32, i32, i32
  }
}

</mosaic_0001>

<llo_original>
// kernel: tpu_custom_call.1
$region0: #{tpu_custom_call.1}
  #allocation0 [shape = 'u32[]', space=smem, size = 0x4, offset = 0x4, fixed_abs, tag = 'smem constant byte address 0x4 - core index']
  #allocation1 [shape = 'u32[144,128]{1,0:T(1,128)}', space=vmem, size = 0x12000, scoped, tag = 'internal scratch']
  %s0 = inlined_call_operand.hbm [shape: f32[2,8,40], index: 0, kind: input, shape index: {}]
  %s1 = inlined_call_operand.hbm [shape: f32[40,48], index: 1, kind: input, shape index: {}]
  %s2 = inlined_call_operand.hbm [shape: f32[2,8,16], index: 2, kind: output, shape index: {}]
  %s3 = sld [smem:[#allocation0]]
  $region26: #{tpu_custom_call.1} parent=0
    _
  %s5 = ssub.s32 1, %s3
  %s6 = scalar_select 0, %s5, %s3
  $region1: #{tpu_custom_call.1} parent=0
    #allocation2 [shape = 'u8[8192]{0}', space=vmem, size = 0x2000, scoped, tag = 'input window, operand 0, single buffered']
    #allocation3 [shape = 's32[1]{0}', space=sflag, size = 0x4, scoped, tag = 'scoped memory for tpu_custom_call.1']
    #allocation4 [shape = 's32[1]{0}', space=sflag, size = 0x4, scoped, tag = 'scoped memory for tpu_custom_call.1']
    #allocation5 [shape = 'u8[20480]{0}', space=vmem, size = 0x5000, scoped, tag = 'input window, operand 1, single buffered']
    #allocation6 [shape = 's32[1]{0}', space=sflag, size = 0x4, scoped, tag = 'scoped memory for tpu_custom_call.1']
    #allocation7 [shape = 'u8[8192]{0}', space=vmem, size = 0x2000, scoped, tag = 'output window, operand 0, single buffered']
    %7 = vsyncpa [#allocation3], 0
    %8 = vsyncpa [#allocation6], 0
    %9 = vsyncpa [#allocation4], 0
    // Predicated region
    $region2: #{tpu_custom_call.1} parent=1 // pred_check
      _
    $region3: #{tpu_custom_call.1} parent=1 // pred_check_branch
      %11 = sbr.rel (0) target = $region5
    $region4: #{tpu_custom_call.1} parent=1 // pred_region
      %s13 = ssub.s32 256, 256
      %14 = vsyncadd [#allocation3], %s13
      %s15 = sshll.u32 [#allocation2], 4
      %s16 = int_to_ptr.vmem [resolvable:$true] %s15
      %21 = dma.hbm_to_vmem [thread:$0]  %s0, 256, %s16, [#allocation3], 128, 128, 8
    $region5: #{tpu_custom_call.1} parent=1 // pred_fallthru
      _
    // Predicated region
    $region6: #{tpu_custom_call.1} parent=1 // pred_check
      _
    $region7: #{tpu_custom_call.1} parent=1 // pred_check_branch
      %23 = sbr.rel (0) target = $region9
    $region8: #{tpu_custom_call.1} parent=1 // pred_region
      %s25 = ssub.s32 640, 640
      %26 = vsyncadd [#allocation6], %s25
      %s27 = sshll.u32 [#allocation5], 4
      %s28 = int_to_ptr.vmem [resolvable:$true] %s27
      %33 = dma.hbm_to_vmem [thread:$0]  %s1, 640, %s28, [#allocation6], 128, 128, 8
    $region9: #{tpu_custom_call.1} parent=1 // pred_fallthru
      _
    // Predicated region
    $region10: #{tpu_custom_call.1} parent=1 // pred_check
      _
    $region11: #{tpu_custom_call.1} parent=1 // pred_check_branch
      %35 = sbr.rel (0) target = $region13
    $region12: #{tpu_custom_call.1} parent=1 // pred_region
      %36 = dma.done [#allocation3], 256
    $region13: #{tpu_custom_call.1} parent=1 // pred_fallthru
      _
    // Predicated region
    $region14: #{tpu_custom_call.1} parent=1 // pred_check
      _
    $region15: #{tpu_custom_call.1} parent=1 // pred_check_branch
      %38 = sbr.rel (0) target = $region17
    $region16: #{tpu_custom_call.1} parent=1 // pred_region
      %39 = dma.done [#allocation6], 640
    $region17: #{tpu_custom_call.1} parent=1 // pred_fallthru
      _
    %v40 = vld [vmem:[#allocation2] sm:$0xff]
    %v41 = vld [vmem:[#allocation2 + $0x8] sm:$0xff]
    %v42 = vld [vmem:[#allocation5] sm:$0xff]
    %v43 = vld [vmem:[#allocation5 + $0x8] sm:$0xff]
    %v44 = vld [vmem:[#allocation5 + $0x10] sm:$0xff]
    %v45 = vld [vmem:[#allocation5 + $0x18] sm:$0xff]
    %v46 = vld [vmem:[#allocation5 + $0x20] sm:$0xff]
    %vm47 = vcmask 326656
    %v49 = vsel %vm47, %v40, 0
    %v52 = vsel %vm47, %v41, 0
    %54 = vmatprep.subr.mxu0 0.0
    %55 = vmatpush1.msra.mxu0 %v42
    %56 = vmatprep.subr.mxu0 0.0
    %57 = vmatpush1.msra.mxu0 %v43
    %58 = vmatprep.subr.mxu0 0.0
    %59 = vmatpush1.msra.mxu0 %v44
    %60 = vmatprep.subr.mxu0 0.0
    %61 = vmatpush1.msra.mxu0 %v45
    %62 = vmatprep.subr.mxu0 0.0
    %63 = vmatpush1.msra.mxu0 %v46
    %64 = vmatprep.subr.mxu0 0.0
    %65 = vmatpush1.msra.mxu0 0.0
    %66 = vmatprep.subr.mxu0 0.0
    %67 = vmatpush1.msra.mxu0 0.0
    %68 = vmatprep.subr.mxu0 0.0
    %69 = vmatpush1.msra.mxu0 0.0
    %70 = vmatprep.subr.mxu0 0.0
    %71 = vmatpush1.msra.mxu0 0.0
    %72 = vmatprep.subr.mxu0 0.0
    %73 = vmatpush1.msra.mxu0 0.0
    %74 = vmatprep.subr.mxu0 0.0
    %75 = vmatpush1.msra.mxu0 0.0
    %76 = vmatprep.subr.mxu0 0.0
    %77 = vmatpush1.msra.mxu0 0.0
    %78 = vmatprep.subr.mxu0 0.0
    %79 = vmatpush1.msra.mxu0 0.0
    %80 = vmatprep.subr.mxu0 0.0
    %81 = vmatpush1.msra.mxu0 0.0
    %82 = vmatprep.subr.mxu0 0.0
    %83 = vmatpush1.msra.mxu0 0.0
    %84 = vmatprep.subr.mxu0 0.0
    %85 = vmatpush1.msra.mxu0 0.0
    %86 = vmatprep.subr.mxu0 0.0
    %87 = vmatpush1.msra.mxu0 0.0
    %88 = vmatprep.subr.mxu0 0.0
    %89 = vmatpush1.msra.mxu0 0.0
    %90 = vmatprep.subr.mxu0 0.0
    %91 = vmatpush1.msra.mxu0 0.0
    %92 = vmatprep.subr.mxu0 0.0
    %93 = vmatpush1.msra.mxu0 0.0
    %94 = vmatprep.subr.mxu0 0.0
    %95 = vmatpush1.msra.mxu0 0.0
    %96 = vmatprep.subr.mxu0 0.0
    %97 = vmatpush1.msra.mxu0 0.0
    %98 = vmatprep.subr.mxu0 0.0
    %99 = vmatpush1.msra.mxu0 0.0
    %100 = vmatprep.subr.mxu0 0.0
    %101 = vmatpush1.msra.mxu0 0.0
    %102 = vmatprep.subr.mxu0 0.0
    %103 = vmatpush1.msra.mxu0 0.0
    %104 = vmatprep.subr.mxu0 0.0
    %105 = vmatpush1.msra.mxu0 0.0
    %106 = vmatprep.subr.mxu0 0.0
    %107 = vmatpush1.msra.mxu0 0.0
    %108 = vmatprep.subr.mxu0 0.0
    %109 = vmatpush1.msra.mxu0 0.0
    %110 = vmatprep.subr.mxu0 0.0
    %111 = vmatpush1.msra.mxu0 0.0
    %112 = vmatprep.subr.mxu0 0.0
    %113 = vmatpush1.msra.mxu0 0.0
    %114 = vmatprep.subr.mxu0 0.0
    %115 = vmatpush1.msra.mxu0 0.0
    %116 = vmatprep.subr.mxu0 0.0
    %117 = vmatpush1.msra.mxu0 0.0
    %118 = vmatprep.mubr.f32.mxu0 0.0
    %119 = vmatmul.mubr.f32.gmra.mrb[0].mxu0 %v49
    %v120 = vpop.f32.mrb[0].mxu0
    %v121 = vadd.f32 0.0, %v120
    %v122 = vpop.f32.mrb[0].mxu0
    %123 = vmatprep.mubr.f32.mxu0 0.0
    %124 = vmatmul.mubr.f32.gmra.mrb[0].mxu0 %v52
    %v125 = vpop.f32.mrb[0].mxu0
    %v126 = vadd.f32 0.0, %v125
    %v127 = vpop.f32.mrb[0].mxu0
    %128 = vdwg.mxu0
    %v129 = vmul.f32 %v121, 0.15811388
    %v130 = vmul.f32 %v126, 0.15811388
    %132 = vrot.lane.b32.xlu0 %v121, 112
    %v133 = vpop.permute.xlu0 %132
    %vm134 = vcmask 130048
    %v136 = vsel %vm134, %v129, 0
    %v138 = vsel %vm134, %v133, 0
    %140 = vmatprep.subr.mxu0 0.0
    %141 = vmatpush1.xpose.msra.mxu0 %v138
    %142 = vmatprep.subr.mxu0 0.0
    %143 = vmatpush1.xpose.msra.mxu0 0.0
    %144 = vmatprep.subr.mxu0 0.0
    %145 = vmatpush1.xpose.msra.mxu0 0.0
    %146 = vmatprep.subr.mxu0 0.0
    %147 = vmatpush1.xpose.msra.mxu0 0.0
    %148 = vmatprep.subr.mxu0 0.0
    %149 = vmatpush1.xpose.msra.mxu0 0.0
    %150 = vmatprep.subr.mxu0 0.0
    %151 = vmatpush1.xpose.msra.mxu0 0.0
    %152 = vmatprep.subr.mxu0 0.0
    %153 = vmatpush1.xpose.msra.mxu0 0.0
    %154 = vmatprep.subr.mxu0 0.0
    %155 = vmatpush1.xpose.msra.mxu0 0.0
    %156 = vmatprep.subr.mxu0 0.0
    %157 = vmatpush1.xpose.msra.mxu0 0.0
    %158 = vmatprep.subr.mxu0 0.0
    %159 = vmatpush1.xpose.msra.mxu0 0.0
    %160 = vmatprep.subr.mxu0 0.0
    %161 = vmatpush1.xpose.msra.mxu0 0.0
    %162 = vmatprep.subr.mxu0 0.0
    %163 = vmatpush1.xpose.msra.mxu0 0.0
    %164 = vmatprep.subr.mxu0 0.0
    %165 = vmatpush1.xpose.msra.mxu0 0.0
    %166 = vmatprep.subr.mxu0 0.0
    %167 = vmatpush1.xpose.msra.mxu0 0.0
    %168 = vmatprep.subr.mxu0 0.0
    %169 = vmatpush1.xpose.msra.mxu0 0.0
    %170 = vmatprep.subr.mxu0 0.0
    %171 = vmatpush1.xpose.msra.mxu0 0.0
    %172 = vmatprep.subr.mxu0 0.0
    %173 = vmatpush1.xpose.msra.mxu0 0.0
    %174 = vmatprep.subr.mxu0 0.0
    %175 = vmatpush1.xpose.msra.mxu0 0.0
    %176 = vmatprep.subr.mxu0 0.0
    %177 = vmatpush1.xpose.msra.mxu0 0.0
    %178 = vmatprep.subr.mxu0 0.0
    %179 = vmatpush1.xpose.msra.mxu0 0.0
    %180 = vmatprep.subr.mxu0 0.0
    %181 = vmatpush1.xpose.msra.mxu0 0.0
    %182 = vmatprep.subr.mxu0 0.0
    %183 = vmatpush1.xpose.msra.mxu0 0.0
    %184 = vmatprep.subr.mxu0 0.0
    %185 = vmatpush1.xpose.msra.mxu0 0.0
    %186 = vmatprep.subr.mxu0 0.0
    %187 = vmatpush1.xpose.msra.mxu0 0.0
    %188 = vmatprep.subr.mxu0 0.0
    %189 = vmatpush1.xpose.msra.mxu0 0.0
    %190 = vmatprep.subr.mxu0 0.0
    %191 = vmatpush1.xpose.msra.mxu0 0.0
    %192 = vmatprep.subr.mxu0 0.0
    %193 = vmatpush1.xpose.msra.mxu0 0.0
    %194 = vmatprep.subr.mxu0 0.0
    %195 = vmatpush1.xpose.msra.mxu0 0.0
    %196 = vmatprep.subr.mxu0 0.0
    %197 = vmatpush1.xpose.msra.mxu0 0.0
    %198 = vmatprep.subr.mxu0 0.0
    %199 = vmatpush1.xpose.msra.mxu0 0.0
    %200 = vmatprep.subr.mxu0 0.0
    %201 = vmatpush1.xpose.msra.mxu0 0.0
    %202 = vmatprep.subr.mxu0 0.0
    %203 = vmatpush1.xpose.msra.mxu0 0.0
    %204 = vmatprep.mubr.f32.mxu0 0.0
    %205 = vmatmul.mubr.f32.gmra.mrb[0].mxu0 %v136
    %v206 = vpop.f32.mrb[0].mxu0
    %v207 = vadd.f32 0.0, %v206
    %v208 = vpop.f32.mrb[0].mxu0
    %209 = vdwg.mxu0
    %211 = vrot.lane.b32.xlu0 %v126, 112
    %v212 = vpop.permute.xlu0 %211
    %v214 = vsel %vm134, %v130, 0
    %v216 = vsel %vm134, %v212, 0
    %218 = vmatprep.subr.mxu0 0.0
    %219 = vmatpush1.xpose.msra.mxu0 %v216
    %220 = vmatprep.subr.mxu0 0.0
    %221 = vmatpush1.xpose.msra.mxu0 0.0
    %222 = vmatprep.subr.mxu0 0.0
    %223 = vmatpush1.xpose.msra.mxu0 0.0
    %224 = vmatprep.subr.mxu0 0.0
    %225 = vmatpush1.xpose.msra.mxu0 0.0
    %226 = vmatprep.subr.mxu0 0.0
    %227 = vmatpush1.xpose.msra.mxu0 0.0
    %228 = vmatprep.subr.mxu0 0.0
    %229 = vmatpush1.xpose.msra.mxu0 0.0
    %230 = vmatprep.subr.mxu0 0.0
    %231 = vmatpush1.xpose.msra.mxu0 0.0
    %232 = vmatprep.subr.mxu0 0.0
    %233 = vmatpush1.xpose.msra.mxu0 0.0
    %234 = vmatprep.subr.mxu0 0.0
    %235 = vmatpush1.xpose.msra.mxu0 0.0
    %236 = vmatprep.subr.mxu0 0.0
    %237 = vmatpush1.xpose.msra.mxu0 0.0
    %238 = vmatprep.subr.mxu0 0.0
    %239 = vmatpush1.xpose.msra.mxu0 0.0
    %240 = vmatprep.subr.mxu0 0.0
    %241 = vmatpush1.xpose.msra.mxu0 0.0
    %242 = vmatprep.subr.mxu0 0.0
    %243 = vmatpush1.xpose.msra.mxu0 0.0
    %244 = vmatprep.subr.mxu0 0.0
    %245 = vmatpush1.xpose.msra.mxu0 0.0
    %246 = vmatprep.subr.mxu0 0.0
    %247 = vmatpush1.xpose.msra.mxu0 0.0
    %248 = vmatprep.subr.mxu0 0.0
    %249 = vmatpush1.xpose.msra.mxu0 0.0
    %250 = vmatprep.subr.mxu0 0.0
    %251 = vmatpush1.xpose.msra.mxu0 0.0
    %252 = vmatprep.subr.mxu0 0.0
    %253 = vmatpush1.xpose.msra.mxu0 0.0
    %254 = vmatprep.subr.mxu0 0.0
    %255 = vmatpush1.xpose.msra.mxu0 0.0
    %256 = vmatprep.subr.mxu0 0.0
    %257 = vmatpush1.xpose.msra.mxu0 0.0
    %258 = vmatprep.subr.mxu0 0.0
    %259 = vmatpush1.xpose.msra.mxu0 0.0
    %260 = vmatprep.subr.mxu0 0.0
    %261 = vmatpush1.xpose.msra.mxu0 0.0
    %262 = vmatprep.subr.mxu0 0.0
    %263 = vmatpush1.xpose.msra.mxu0 0.0
    %264 = vmatprep.subr.mxu0 0.0
    %265 = vmatpush1.xpose.msra.mxu0 0.0
    %266 = vmatprep.subr.mxu0 0.0
    %267 = vmatpush1.xpose.msra.mxu0 0.0
    %268 = vmatprep.subr.mxu0 0.0
    %269 = vmatpush1.xpose.msra.mxu0 0.0
    %270 = vmatprep.subr.mxu0 0.0
    %271 = vmatpush1.xpose.msra.mxu0 0.0
    %272 = vmatprep.subr.mxu0 0.0
    %273 = vmatpush1.xpose.msra.mxu0 0.0
    %274 = vmatprep.subr.mxu0 0.0
    %275 = vmatpush1.xpose.msra.mxu0 0.0
    %276 = vmatprep.subr.mxu0 0.0
    %277 = vmatpush1.xpose.msra.mxu0 0.0
    %278 = vmatprep.subr.mxu0 0.0
    %279 = vmatpush1.xpose.msra.mxu0 0.0
    %280 = vmatprep.subr.mxu0 0.0
    %281 = vmatpush1.xpose.msra.mxu0 0.0
    %282 = vmatprep.mubr.f32.mxu0 0.0
    %283 = vmatmul.mubr.f32.gmra.mrb[0].mxu0 %v214
    %v284 = vpop.f32.mrb[0].mxu0
    %v285 = vadd.f32 0.0, %v284
    %v286 = vpop.f32.mrb[0].mxu0
    %287 = vdwg.mxu0
    %v288 = vlaneseq
    %v289 = vshrl.u32 %v288, 7
    %v290 = vlaneseq
    %v291 = vand.u32 %v290, 127
    %vm292 = vcmp.le.s32.totalorder %v291, %v289
    %v293 = vsel %vm292, 1, 0
    %vm294 = vcmp.eq.s32.totalorder %v293, 1
    %v295 = vsel %vm294, %v207, -inf
    %v296 = vsel %vm294, %v285, -inf
    %vm297 = vcmask 64512
    %v298 = vsel %vm297, %v295, -inf
    %299 = vmax.xlane.f32.xlu0 %v298
    %v300 = vpop.xlane.xlu0 %299
    %v301 = vsel %vm297, %v296, -inf
    %302 = vmax.xlane.f32.xlu0 %v301
    %v303 = vpop.xlane.xlu0 %302
    %v304 = vsub.f32 %v295, %v300
    %v305 = vsub.f32 %v296, %v303
    %v306 = vmul.f32 %v304, 1.442695
    %v307 = vpow.pop %v306
    %v308 = vmul.f32 %v305, 1.442695
    %v309 = vpow.pop %v308
    %v310 = vsel %vm297, %v307, 0.0
    %311 = vadd.xlane.f32.xlu0 %v310
    %v312 = vpop.xlane.xlu0 %311
    %v313 = vsel %vm297, %v309, 0.0
    %314 = vadd.xlane.f32.xlu0 %v313
    %v315 = vpop.xlane.xlu0 %314
    %v316 = vrcp.pop %v312
    %v317 = vmul.f32 %v307, %v316
    %v318 = vrcp.pop %v315
    %v319 = vmul.f32 %v309, %v318
    %320 = vrot.lane.b32.xlu0 %v121, 96
    %v321 = vpop.permute.xlu0 %320
    %v324 = vsel %vm297, %v317, 0
    %326 = vmatprep.subr.mxu0 0.0
    %327 = vmatpush1.msra.mxu0 %v321
    %328 = vmatprep.subr.mxu0 0.0
    %329 = vmatpush1.msra.mxu0 0.0
    %330 = vmatprep.subr.mxu0 0.0
    %331 = vmatpush1.msra.mxu0 0.0
    %332 = vmatprep.subr.mxu0 0.0
    %333 = vmatpush1.msra.mxu0 0.0
    %334 = vmatprep.subr.mxu0 0.0
    %335 = vmatpush1.msra.mxu0 0.0
    %336 = vmatprep.subr.mxu0 0.0
    %337 = vmatpush1.msra.mxu0 0.0
    %338 = vmatprep.subr.mxu0 0.0
    %339 = vmatpush1.msra.mxu0 0.0
    %340 = vmatprep.subr.mxu0 0.0
    %341 = vmatpush1.msra.mxu0 0.0
    %342 = vmatprep.subr.mxu0 0.0
    %343 = vmatpush1.msra.mxu0 0.0
    %344 = vmatprep.subr.mxu0 0.0
    %345 = vmatpush1.msra.mxu0 0.0
    %346 = vmatprep.subr.mxu0 0.0
    %347 = vmatpush1.msra.mxu0 0.0
    %348 = vmatprep.subr.mxu0 0.0
    %349 = vmatpush1.msra.mxu0 0.0
    %350 = vmatprep.subr.mxu0 0.0
    %351 = vmatpush1.msra.mxu0 0.0
    %352 = vmatprep.subr.mxu0 0.0
    %353 = vmatpush1.msra.mxu0 0.0
    %354 = vmatprep.subr.mxu0 0.0
    %355 = vmatpush1.msra.mxu0 0.0
    %356 = vmatprep.subr.mxu0 0.0
    %357 = vmatpush1.msra.mxu0 0.0
    %358 = vmatprep.subr.mxu0 0.0
    %359 = vmatpush1.msra.mxu0 0.0
    %360 = vmatprep.subr.mxu0 0.0
    %361 = vmatpush1.msra.mxu0 0.0
    %362 = vmatprep.subr.mxu0 0.0
    %363 = vmatpush1.msra.mxu0 0.0
    %364 = vmatprep.subr.mxu0 0.0
    %365 = vmatpush1.msra.mxu0 0.0
    %366 = vmatprep.subr.mxu0 0.0
    %367 = vmatpush1.msra.mxu0 0.0
    %368 = vmatprep.subr.mxu0 0.0
    %369 = vmatpush1.msra.mxu0 0.0
    %370 = vmatprep.subr.mxu0 0.0
    %371 = vmatpush1.msra.mxu0 0.0
    %372 = vmatprep.subr.mxu0 0.0
    %373 = vmatpush1.msra.mxu0 0.0
    %374 = vmatprep.subr.mxu0 0.0
    %375 = vmatpush1.msra.mxu0 0.0
    %376 = vmatprep.subr.mxu0 0.0
    %377 = vmatpush1.msra.mxu0 0.0
    %378 = vmatprep.subr.mxu0 0.0
    %379 = vmatpush1.msra.mxu0 0.0
    %380 = vmatprep.subr.mxu0 0.0
    %381 = vmatpush1.msra.mxu0 0.0
    %382 = vmatprep.subr.mxu0 0.0
    %383 = vmatpush1.msra.mxu0 0.0
    %384 = vmatprep.subr.mxu0 0.0
    %385 = vmatpush1.msra.mxu0 0.0
    %386 = vmatprep.subr.mxu0 0.0
    %387 = vmatpush1.msra.mxu0 0.0
    %388 = vmatprep.subr.mxu0 0.0
    %389 = vmatpush1.msra.mxu0 0.0
    %390 = vmatprep.mubr.f32.mxu0 0.0
    %391 = vmatmul.mubr.f32.gmra.mrb[0].mxu0 %v324
    %v392 = vpop.f32.mrb[0].mxu0
    %v393 = vadd.f32 0.0, %v392
    %v394 = vpop.f32.mrb[0].mxu0
    %395 = vdwg.mxu0
    %396 = vrot.lane.b32.xlu0 %v126, 96
    %v397 = vpop.permute.xlu0 %396
    %v400 = vsel %vm297, %v319, 0
    %402 = vmatprep.subr.mxu0 0.0
    %403 = vmatpush1.msra.mxu0 %v397
    %404 = vmatprep.subr.mxu0 0.0
    %405 = vmatpush1.msra.mxu0 0.0
    %406 = vmatprep.subr.mxu0 0.0
    %407 = vmatpush1.msra.mxu0 0.0
    %408 = vmatprep.subr.mxu0 0.0
    %409 = vmatpush1.msra.mxu0 0.0
    %410 = vmatprep.subr.mxu0 0.0
    %411 = vmatpush1.msra.mxu0 0.0
    %412 = vmatprep.subr.mxu0 0.0
    %413 = vmatpush1.msra.mxu0 0.0
    %414 = vmatprep.subr.mxu0 0.0
    %415 = vmatpush1.msra.mxu0 0.0
    %416 = vmatprep.subr.mxu0 0.0
    %417 = vmatpush1.msra.mxu0 0.0
    %418 = vmatprep.subr.mxu0 0.0
    %419 = vmatpush1.msra.mxu0 0.0
    %420 = vmatprep.subr.mxu0 0.0
    %421 = vmatpush1.msra.mxu0 0.0
    %422 = vmatprep.subr.mxu0 0.0
    %423 = vmatpush1.msra.mxu0 0.0
    %424 = vmatprep.subr.mxu0 0.0
    %425 = vmatpush1.msra.mxu0 0.0
    %426 = vmatprep.subr.mxu0 0.0
    %427 = vmatpush1.msra.mxu0 0.0
    %428 = vmatprep.subr.mxu0 0.0
    %429 = vmatpush1.msra.mxu0 0.0
    %430 = vmatprep.subr.mxu0 0.0
    %431 = vmatpush1.msra.mxu0 0.0
    %432 = vmatprep.subr.mxu0 0.0
    %433 = vmatpush1.msra.mxu0 0.0
    %434 = vmatprep.subr.mxu0 0.0
    %435 = vmatpush1.msra.mxu0 0.0
    %436 = vmatprep.subr.mxu0 0.0
    %437 = vmatpush1.msra.mxu0 0.0
    %438 = vmatprep.subr.mxu0 0.0
    %439 = vmatpush1.msra.mxu0 0.0
    %440 = vmatprep.subr.mxu0 0.0
    %441 = vmatpush1.msra.mxu0 0.0
    %442 = vmatprep.subr.mxu0 0.0
    %443 = vmatpush1.msra.mxu0 0.0
    %444 = vmatprep.subr.mxu0 0.0
    %445 = vmatpush1.msra.mxu0 0.0
    %446 = vmatprep.subr.mxu0 0.0
    %447 = vmatpush1.msra.mxu0 0.0
    %448 = vmatprep.subr.mxu0 0.0
    %449 = vmatpush1.msra.mxu0 0.0
    %450 = vmatprep.subr.mxu0 0.0
    %451 = vmatpush1.msra.mxu0 0.0
    %452 = vmatprep.subr.mxu0 0.0
    %453 = vmatpush1.msra.mxu0 0.0
    %454 = vmatprep.subr.mxu0 0.0
    %455 = vmatpush1.msra.mxu0 0.0
    %456 = vmatprep.subr.mxu0 0.0
    %457 = vmatpush1.msra.mxu0 0.0
    %458 = vmatprep.subr.mxu0 0.0
    %459 = vmatpush1.msra.mxu0 0.0
    %460 = vmatprep.subr.mxu0 0.0
    %461 = vmatpush1.msra.mxu0 0.0
    %462 = vmatprep.subr.mxu0 0.0
    %463 = vmatpush1.msra.mxu0 0.0
    %464 = vmatprep.subr.mxu0 0.0
    %465 = vmatpush1.msra.mxu0 0.0
    %466 = vmatprep.mubr.f32.mxu0 0.0
    %467 = vmatmul.mubr.f32.gmra.mrb[0].mxu0 %v400
    %v468 = vpop.f32.mrb[0].mxu0
    %v469 = vadd.f32 0.0, %v468
    %v470 = vpop.f32.mrb[0].mxu0
    %471 = vdwg.mxu0
    %472 = vst.msk [vmem:[#allocation7] sm:$0xff] %vm134, %v393
    %473 = vst.msk [vmem:[#allocation7 + $0x8] sm:$0xff] %vm134, %v469
    // Predicated region
    $region18: #{tpu_custom_call.1} parent=1 // pred_check
      _
    $region19: #{tpu_custom_call.1} parent=1 // pred_check_branch
      %475 = sbr.rel (0) target = $region21
    $region20: #{tpu_custom_call.1} parent=1 // pred_region
      %s477 = ssub.s32 256, 256
      %478 = vsyncadd [#allocation4], %s477
      %s479 = sshll.u32 [#allocation7], 4
      %s480 = int_to_ptr.vmem [resolvable:$true] %s479
      %485 = dma.vmem_to_hbm [thread:$0]  %s480, 256, %s2, [#allocation4], 128, 128, 8
    $region21: #{tpu_custom_call.1} parent=1 // pred_fallthru
      _
    // Predicated region
    $region22: #{tpu_custom_call.1} parent=1 // pred_check
      _
    $region23: #{tpu_custom_call.1} parent=1 // pred_check_branch
      %487 = sbr.rel (0) target = $region25
    $region24: #{tpu_custom_call.1} parent=1 // pred_region
      %488 = dma.done [#allocation4], 256
    $region25: #{tpu_custom_call.1} parent=1 // pred_fallthru
      _
    %489 = vsyncpa [#allocation3], 1
    %490 = vsyncpa [#allocation6], 1
    %491 = vsyncpa [#allocation4], 1

</llo_original>
